<compile_context>
chip_gen: v7x
topology: tpu7x:2x2x1
jax: 0.10.0
libtpu: 0.0.40
codegen_flags: <defaults>
</compile_context>

<pallas_src>
import math

import jax
import jax.numpy as jnp
from jax import lax
from jax.experimental import pallas as pl
from jax.experimental.pallas import tpu as pltpu


# Taylor coefficients (exact Python floats, evaluated via Horner in y = x**2):
#   cos(pi*x)    = sum_k COS[k] * y**k       for x in [-1, 1]   (|err| ~ 1e-7)
#   sin(pi*x)/x  = sum_k SIN[k] * y**k
_COS_PI = [(-1.0) ** k * math.pi ** (2 * k) / math.factorial(2 * k) for k in range(9)]
_SIN_PI = [(-1.0) ** k * math.pi ** (2 * k + 1) / math.factorial(2 * k + 1) for k in range(9)]


def _cospi_sinpi(x):
    """cos(pi*x), sin(pi*x) for x in [-1, 1] — VPU-only polynomials."""
    y = x * x
    c = _COS_PI[-1]
    for coef in reversed(_COS_PI[:-1]):
        c = c * y + coef
    s = _SIN_PI[-1]
    for coef in reversed(_SIN_PI[:-1]):
        s = s * y + coef
    return c, s * x


def _bits_to_f12(bits_u32):
    """uint32 random bits -> f32 uniform in [1, 2) via the exponent bit-trick."""
    return lax.bitcast_convert_type((bits_u32 >> 9) | 0x3F800000, jnp.float32)


def _as_u32(bits):
    return bits if bits.dtype == jnp.uint32 else lax.bitcast_convert_type(bits, jnp.uint32)


def _boxmuller(b1, b2):
    """Two equal-shape uint32 blocks -> two N(0,1) blocks (full Box-Muller).

    One random word per output element.  Tails truncate at ~5.6 sigma
    (u1 >= 2^-23), which is fine for a mock randn.
    """
    u1 = 2.0 - _bits_to_f12(b1)            # (0, 1]  -> log-safe
    x = 2.0 * _bits_to_f12(b2) - 3.0       # [-1, 1) -> theta = pi*x + pi
    # cos(theta) = -cos(pi*x), sin(theta) = -sin(pi*x): fold both signs into r.
    r = -jnp.sqrt(-2.0 * jnp.log(u1))
    c, s = _cospi_sinpi(x)
    return r * c, r * s


def _randn_kernel_hw_prng(seed_ref, o_ref):
    """Output-only tile fill using the TPU hardware PRNG."""
    # Distinct stream per grid step (and per TensorCore on megacore parts).
    pltpu.prng_seed(seed_ref[0], pl.program_id(0), pl.program_id(1))
    h = o_ref.shape[0] // 2
    b1 = _as_u32(pltpu.prng_random_bits((h, o_ref.shape[1])))
    b2 = _as_u32(pltpu.prng_random_bits((h, o_ref.shape[1])))
    z0, z1 = _boxmuller(b1, b2)
    # Direct sublane-aligned slice stores (h is a multiple of 8):
    # no concatenate, no extra VMEM temp / vst pressure.
    o_ref[:h, :] = z0
    o_ref[h:, :] = z1


def _randn_kernel_from_bits(bits_ref, o_ref):
    """Fallback: same math, random words supplied as an input tile."""
    h = o_ref.shape[0] // 2
    z0, z1 = _boxmuller(bits_ref[:h, :], bits_ref[h:, :])
    o_ref[:h, :] = z0
    o_ref[h:, :] = z1


def _round_up(n, m):
    return ((n + m - 1) // m) * m


def _pick_tile(dim, preferred, align):
    """Largest multiple of `align` that divides `dim` and is <= preferred."""
    t = max(align, min(dim, preferred) // align * align)
    while dim % t:
        t -= align
    return t


def _randn_2d_hw_prng(rows, cols, tr, tv, seed):
    seed_arr = jnp.asarray([seed], dtype=jnp.int32)
    return pl.pallas_call(
        _randn_kernel_hw_prng,
        out_shape=jax.ShapeDtypeStruct((rows, cols), jnp.float32),
        grid_spec=pltpu.PrefetchScalarGridSpec(
            num_scalar_prefetch=1,
            grid=(rows // tr, cols // tv),
            in_specs=[],
            out_specs=pl.BlockSpec((tr, tv), lambda i, j, seed_ref: (i, j)),
        ),
        compiler_params=pltpu.CompilerParams(
            dimension_semantics=("parallel", "parallel")),
    )(seed_arr)


def _randn_2d_from_bits(rows, cols, tr, tv, seed):
    bits = jax.random.bits(jax.random.PRNGKey(seed), (rows, cols), dtype=jnp.uint32)
    return pl.pallas_call(
        _randn_kernel_from_bits,
        out_shape=jax.ShapeDtypeStruct((rows, cols), jnp.float32),
        grid=(rows // tr, cols // tv),
        in_specs=[pl.BlockSpec((tr, tv), lambda i, j: (i, j))],
        out_specs=pl.BlockSpec((tr, tv), lambda i, j: (i, j)),
        compiler_params=pltpu.CompilerParams(
            dimension_semantics=("parallel", "parallel")),
    )(bits)


def init_mock_model_params(vocab_size, key=None):
    """Init of the nn.Linear(10, vocab_size) held by MockModel.__init__.

    TODO(synk): MockModel.forward never applies this layer; it is initialized
    for fidelity with the PyTorch module but intentionally unused.
    """
    if key is None:
        key = jax.random.PRNGKey(0)
    kw, kb = jax.random.split(key)
    bound = 1.0 / math.sqrt(10.0)  # PyTorch default: U(-1/sqrt(fan_in), +...)
    weight = jax.random.uniform(kw, (vocab_size, 10), jnp.float32, -bound, bound)
    bias = jax.random.uniform(kb, (vocab_size,), jnp.float32, -bound, bound)
    return {"linear.weight": weight, "linear.bias": bias}


def mock_model_forward(x, vocab_size, seed=0):
    """Equivalent of MockModel.forward: returns randn(batch, seq, vocab)."""
    batch_size, seq_len = x.shape
    rows = batch_size * seq_len

    # Pad to a lane/sublane-aligned 2D slab so every tile and every half-tile
    # store is (8, 128)-aligned; slice the padding off afterwards.
    rows_p = _round_up(max(rows, 16), 16)     # multiple of 16 -> even, aligned halves
    cols_p = _round_up(vocab_size, 128)       # lane-aligned

    out2d = None
    if jax.default_backend() == "tpu":
        # Keep >=2 row tiles when possible so both v7x TensorCores get work.
        tr = _pick_tile(rows_p, min(512, max(16, rows_p // 2)), 16)
        tv = _pick_tile(cols_p, 2048, 128)
        try:
            out2d = jax.block_until_ready(
                _randn_2d_hw_prng(rows_p, cols_p, tr, tv, seed))
        except Exception:
            # Interpret-mode sandboxes may not lower the HW PRNG; fall back.
            out2d = None
    if out2d is None:
        tr = _pick_tile(rows_p, min(256, max(16, rows_p // 2)), 16)
        tv = _pick_tile(cols_p, 2048, 128)
        out2d = _randn_2d_from_bits(rows_p, cols_p, tr, tv, seed)

    return out2d[:rows, :vocab_size].reshape(batch_size, seq_len, vocab_size)


if __name__ == "__main__":
    VOCAB_SIZE = 128   # lane-aligned vocab for clean (8, 128) tiling
    BATCH, SEQ = 2, 8

    key = jax.random.PRNGKey(0)
    k_x, k_params = jax.random.split(key)

    # Input token ids: only the shape matters to forward().
    x = jax.random.randint(k_x, (BATCH, SEQ), 0, VOCAB_SIZE, dtype=jnp.int32)
    params = init_mock_model_params(VOCAB_SIZE, k_params)  # held, never applied

    out = mock_model_forward(x, VOCAB_SIZE, seed=0)
    out = jax.block_until_ready(out)

    assert out.shape == (BATCH, SEQ, VOCAB_SIZE), out.shape
    assert out.dtype == jnp.float32, out.dtype
    assert bool(jnp.all(jnp.isfinite(out)))
    # Sanity: 2048 samples should look roughly standard-normal.
    assert abs(float(out.mean())) < 0.4, float(out.mean())
    assert 0.6 < float(out.std()) < 1.4, float(out.std())

    print("KERNEL_OK")
</pallas_src>

<mosaic_0001>
module attributes {stable_mosaic.version = 11 : i64} {
  func.func @_randn_kernel_from_bits(%arg0: i32, %arg1: i32, %arg2: memref<16x128xi32, #tpu.memory_space<vmem>>, %arg3: memref<16x128xf32, #tpu.memory_space<vmem>>) attributes {dimension_semantics = [#tpu.dimension_semantics<parallel>, #tpu.dimension_semantics<parallel>], iteration_bounds = array<i64: 1, 1>, scalar_prefetch = 0 : i64, scratch_operands = 0 : i64, tpu.core_type = #tpu.core_type<tc>, window_params = [{transform_indices = @transform_0, window_bounds = array<i64: 16, 128>}, {transform_indices = @transform_1, window_bounds = array<i64: 16, 128>}]} {
    %c0 = arith.constant 0 : index
    %c0_0 = arith.constant 0 : index
    %0 = vector.load %arg2[%c0, %c0_0] : memref<16x128xi32, #tpu.memory_space<vmem>>, vector<8x128xi32>
    %c8 = arith.constant 8 : index
    %c0_1 = arith.constant 0 : index
    %1 = vector.load %arg2[%c8, %c0_1] : memref<16x128xi32, #tpu.memory_space<vmem>>, vector<8x128xi32>
    %c9_i32 = arith.constant 9 : i32
    %2 = vector.broadcast %c9_i32 : i32 to vector<8x128xi32>
    %3 = arith.shrui %0, %2 : vector<8x128xi32>
    %c1065353216_i32 = arith.constant 1065353216 : i32
    %4 = vector.broadcast %c1065353216_i32 : i32 to vector<8x128xi32>
    %5 = arith.ori %3, %4 : vector<8x128xi32>
    %6 = tpu.bitcast %5 : vector<8x128xi32> -> vector<8x128xf32>
    %cst = arith.constant 2.000000e+00 : f32
    %7 = vector.broadcast %cst : f32 to vector<8x128xf32>
    %8 = arith.subf %7, %6 : vector<8x128xf32>
    %c9_i32_2 = arith.constant 9 : i32
    %9 = vector.broadcast %c9_i32_2 : i32 to vector<8x128xi32>
    %10 = arith.shrui %1, %9 : vector<8x128xi32>
    %c1065353216_i32_3 = arith.constant 1065353216 : i32
    %11 = vector.broadcast %c1065353216_i32_3 : i32 to vector<8x128xi32>
    %12 = arith.ori %10, %11 : vector<8x128xi32>
    %13 = tpu.bitcast %12 : vector<8x128xi32> -> vector<8x128xf32>
    %cst_4 = arith.constant 2.000000e+00 : f32
    %14 = vector.broadcast %cst_4 : f32 to vector<8x128xf32>
    %15 = arith.mulf %14, %13 : vector<8x128xf32>
    %cst_5 = arith.constant 3.000000e+00 : f32
    %16 = vector.broadcast %cst_5 : f32 to vector<8x128xf32>
    %17 = arith.subf %15, %16 : vector<8x128xf32>
    %18 = math.log %8 : vector<8x128xf32>
    %cst_6 = arith.constant -2.000000e+00 : f32
    %19 = vector.broadcast %cst_6 : f32 to vector<8x128xf32>
    %20 = arith.mulf %19, %18 : vector<8x128xf32>
    %21 = math.sqrt %20 : vector<8x128xf32>
    %cst_7 = arith.constant 0.000000e+00 : f32
    %22 = vector.broadcast %cst_7 : f32 to vector<8x128xf32>
    %23 = arith.subf %22, %21 : vector<8x128xf32>
    %24 = arith.mulf %17, %17 : vector<8x128xf32>
    %cst_8 = arith.constant 4.30306955E-6 : f32
    %25 = vector.broadcast %cst_8 : f32 to vector<8x128xf32>
    %26 = arith.mulf %25, %24 : vector<8x128xf32>
    %cst_9 = arith.constant -1.04638108E-4 : f32
    %27 = vector.broadcast %cst_9 : f32 to vector<8x128xf32>
    %28 = arith.addf %26, %27 : vector<8x128xf32>
    %29 = arith.mulf %28, %24 : vector<8x128xf32>
    %cst_10 = arith.constant 0.0019295743 : f32
    %30 = vector.broadcast %cst_10 : f32 to vector<8x128xf32>
    %31 = arith.addf %29, %30 : vector<8x128xf32>
    %32 = arith.mulf %31, %24 : vector<8x128xf32>
    %cst_11 = arith.constant -0.0258068908 : f32
    %33 = vector.broadcast %cst_11 : f32 to vector<8x128xf32>
    %34 = arith.addf %32, %33 : vector<8x128xf32>
    %35 = arith.mulf %34, %24 : vector<8x128xf32>
    %cst_12 = arith.constant 0.235330626 : f32
    %36 = vector.broadcast %cst_12 : f32 to vector<8x128xf32>
    %37 = arith.addf %35, %36 : vector<8x128xf32>
    %38 = arith.mulf %37, %24 : vector<8x128xf32>
    %cst_13 = arith.constant -1.33526278 : f32
    %39 = vector.broadcast %cst_13 : f32 to vector<8x128xf32>
    %40 = arith.addf %38, %39 : vector<8x128xf32>
    %41 = arith.mulf %40, %24 : vector<8x128xf32>
    %cst_14 = arith.constant 4.05871201 : f32
    %42 = vector.broadcast %cst_14 : f32 to vector<8x128xf32>
    %43 = arith.addf %41, %42 : vector<8x128xf32>
    %44 = arith.mulf %43, %24 : vector<8x128xf32>
    %cst_15 = arith.constant -4.93480206 : f32
    %45 = vector.broadcast %cst_15 : f32 to vector<8x128xf32>
    %46 = arith.addf %44, %45 : vector<8x128xf32>
    %47 = arith.mulf %46, %24 : vector<8x128xf32>
    %cst_16 = arith.constant 1.000000e+00 : f32
    %48 = vector.broadcast %cst_16 : f32 to vector<8x128xf32>
    %49 = arith.addf %47, %48 : vector<8x128xf32>
    %cst_17 = arith.constant 7.95205381E-7 : f32
    %50 = vector.broadcast %cst_17 : f32 to vector<8x128xf32>
    %51 = arith.mulf %50, %24 : vector<8x128xf32>
    %cst_18 = arith.constant -2.19153535E-5 : f32
    %52 = vector.broadcast %cst_18 : f32 to vector<8x128xf32>
    %53 = arith.addf %51, %52 : vector<8x128xf32>
    %54 = arith.mulf %53, %24 : vector<8x128xf32>
    %cst_19 = arith.constant 4.66302794E-4 : f32
    %55 = vector.broadcast %cst_19 : f32 to vector<8x128xf32>
    %56 = arith.addf %54, %55 : vector<8x128xf32>
    %57 = arith.mulf %56, %24 : vector<8x128xf32>
    %cst_20 = arith.constant -0.00737043098 : f32
    %58 = vector.broadcast %cst_20 : f32 to vector<8x128xf32>
    %59 = arith.addf %57, %58 : vector<8x128xf32>
    %60 = arith.mulf %59, %24 : vector<8x128xf32>
    %cst_21 = arith.constant 0.0821458846 : f32
    %61 = vector.broadcast %cst_21 : f32 to vector<8x128xf32>
    %62 = arith.addf %60, %61 : vector<8x128xf32>
    %63 = arith.mulf %62, %24 : vector<8x128xf32>
    %cst_22 = arith.constant -0.599264503 : f32
    %64 = vector.broadcast %cst_22 : f32 to vector<8x128xf32>
    %65 = arith.addf %63, %64 : vector<8x128xf32>
    %66 = arith.mulf %65, %24 : vector<8x128xf32>
    %cst_23 = arith.constant 2.55016398 : f32
    %67 = vector.broadcast %cst_23 : f32 to vector<8x128xf32>
    %68 = arith.addf %66, %67 : vector<8x128xf32>
    %69 = arith.mulf %68, %24 : vector<8x128xf32>
    %cst_24 = arith.constant -5.16771269 : f32
    %70 = vector.broadcast %cst_24 : f32 to vector<8x128xf32>
    %71 = arith.addf %69, %70 : vector<8x128xf32>
    %72 = arith.mulf %71, %24 : vector<8x128xf32>
    %cst_25 = arith.constant 3.14159274 : f32
    %73 = vector.broadcast %cst_25 : f32 to vector<8x128xf32>
    %74 = arith.addf %72, %73 : vector<8x128xf32>
    %75 = arith.mulf %74, %17 : vector<8x128xf32>
    %76 = arith.mulf %23, %49 : vector<8x128xf32>
    %77 = arith.mulf %23, %75 : vector<8x128xf32>
    %c0_26 = arith.constant 0 : index
    %c0_27 = arith.constant 0 : index
    %78 = vector.load %arg3[%c0_26, %c0_27] : memref<16x128xf32, #tpu.memory_space<vmem>>, vector<8x128xf32>
    tpu.vector_store %arg3[%c0_26, %c0_27], %76 {strides = array<i32>} : memref<16x128xf32, #tpu.memory_space<vmem>>, vector<8x128xf32>,
    %c8_28 = arith.constant 8 : index
    %c0_29 = arith.constant 0 : index
    %79 = vector.load %arg3[%c8_28, %c0_29] : memref<16x128xf32, #tpu.memory_space<vmem>>, vector<8x128xf32>
    tpu.vector_store %arg3[%c8_28, %c0_29], %77 {strides = array<i32>} : memref<16x128xf32, #tpu.memory_space<vmem>>, vector<8x128xf32>,
    return
  }
  func.func @transform_0(%arg0: i32, %arg1: i32) -> (i32, i32) {
    %c0_i32 = arith.constant 0 : i32
    return %arg0, %arg1 : i32, i32
  }
  func.func @transform_1(%arg0: i32, %arg1: i32) -> (i32, i32) {
    %c0_i32 = arith.constant 0 : i32
    return %arg0, %arg1 : i32, i32
  }
}

</mosaic_0001>

<llo_original>
// kernel: tpu_custom_call.1
$region0: #{tpu_custom_call.1}
  #allocation0 [shape = 'u32[]', space=smem, size = 0x4, offset = 0x4, fixed_abs, tag = 'smem constant byte address 0x4 - core index']
  #allocation1 [shape = 'u32[144,128]{1,0:T(1,128)}', space=vmem, size = 0x12000, scoped, tag = 'internal scratch']
  %s0 = inlined_call_operand.hbm [shape: u32[16,128], index: 0, kind: input, shape index: {}]
  %s1 = inlined_call_operand.hbm [shape: f32[16,128], index: 1, kind: output, shape index: {}]
  %s2 = sld [smem:[#allocation0]]
  $region18: #{tpu_custom_call.1} parent=0
    _
  %s4 = ssub.s32 1, %s2
  %s5 = scalar_select 0, %s4, %s2
  $region1: #{tpu_custom_call.1} parent=0
    #allocation2 [shape = 'u8[8192]{0}', space=vmem, size = 0x2000, scoped, tag = 'input window, operand 0, single buffered']
    #allocation3 [shape = 's32[1]{0}', space=sflag, size = 0x4, scoped, tag = 'scoped memory for tpu_custom_call.1']
    #allocation4 [shape = 's32[1]{0}', space=sflag, size = 0x4, scoped, tag = 'scoped memory for tpu_custom_call.1']
    #allocation5 [shape = 'u8[8192]{0}', space=vmem, size = 0x2000, scoped, tag = 'output window, operand 0, single buffered']
    %6 = vsyncpa [#allocation3], 0
    %7 = vsyncpa [#allocation4], 0
    // Predicated region
    $region2: #{tpu_custom_call.1} parent=1 // pred_check
      _
    $region3: #{tpu_custom_call.1} parent=1 // pred_check_branch
      %9 = sbr.rel (0) target = $region5
    $region4: #{tpu_custom_call.1} parent=1 // pred_region
      %s11 = ssub.s32 256, 256
      %12 = vsyncadd [#allocation3], %s11
      %s13 = sshll.u32 [#allocation2], 4
      %s14 = int_to_ptr.vmem [resolvable:$true] %s13
      %19 = dma.hbm_to_vmem [thread:$0]  %s0, 256, %s14, [#allocation3], 128, 128, 8
    $region5: #{tpu_custom_call.1} parent=1 // pred_fallthru
      _
    // Predicated region
    $region6: #{tpu_custom_call.1} parent=1 // pred_check
      _
    $region7: #{tpu_custom_call.1} parent=1 // pred_check_branch
      %21 = sbr.rel (0) target = $region9
    $region8: #{tpu_custom_call.1} parent=1 // pred_region
      %22 = dma.done [#allocation3], 256
    $region9: #{tpu_custom_call.1} parent=1 // pred_fallthru
      _
    %v23 = vld [vmem:[#allocation2] sm:$0xff]
    %v24 = vld [vmem:[#allocation2 + $0x8] sm:$0xff]
    %v25 = vshrl.u32 %v23, 9
    %v26 = vor.u32 %v25, 1065353216
    %v28 = vsub.f32 2.0, %v26
    %v29 = vshrl.u32 %v24, 9
    %v30 = vor.u32 %v29, 1065353216
    %v32 = vmul.f32 %v30, 2.0
    %v33 = vsub.f32 %v32, 3.0
    %v34 = vlog2.pop %v28
    %v35 = vmul.f32 %v34, 0.6931472
    %v36 = vmul.f32 %v35, -2.0
    %v37 = vrsqrt.pop %v36
    %v38 = vmul.f32 %v36, %v37
    %vm39 = vcmp.eq.f32.partialorder %v36, inf
    %v40 = vsel %vm39, %v36, %v38
    %vm41 = vcmp.eq.f32.partialorder %v36, 0.0
    %v42 = vand.u32 %v36, 2147483648
    %v43 = vsel %vm41, %v42, %v40
    %v44 = vsub.f32 0.0, %v43
    %v45 = vmul.f32 %v33, %v33
    %v46 = vmul.f32 %v45, 4.3030695e-06
    %v47 = vadd.f32 %v46, -0.00010463811
    %v48 = vmul.f32 %v47, %v45
    %v49 = vadd.f32 %v48, 0.0019295743
    %v50 = vmul.f32 %v49, %v45
    %v51 = vadd.f32 %v50, -0.02580689
    %v52 = vmul.f32 %v51, %v45
    %v53 = vadd.f32 %v52, 0.23533063
    %v54 = vmul.f32 %v53, %v45
    %v55 = vadd.f32 %v54, -1.3352628
    %v56 = vmul.f32 %v55, %v45
    %v57 = vadd.f32 %v56, 4.058712
    %v58 = vmul.f32 %v57, %v45
    %v59 = vadd.f32 %v58, -4.934802
    %v60 = vmul.f32 %v59, %v45
    %v61 = vadd.f32 %v60, 1.0
    %v62 = vmul.f32 %v45, 7.952054e-07
    %v63 = vadd.f32 %v62, -2.1915353e-05
    %v64 = vmul.f32 %v63, %v45
    %v65 = vadd.f32 %v64, 0.0004663028
    %v66 = vmul.f32 %v65, %v45
    %v67 = vadd.f32 %v66, -0.007370431
    %v68 = vmul.f32 %v67, %v45
    %v69 = vadd.f32 %v68, 0.082145885
    %v70 = vmul.f32 %v69, %v45
    %v71 = vadd.f32 %v70, -0.5992645
    %v72 = vmul.f32 %v71, %v45
    %v73 = vadd.f32 %v72, 2.550164
    %v74 = vmul.f32 %v73, %v45
    %v75 = vadd.f32 %v74, -5.1677127
    %v76 = vmul.f32 %v75, %v45
    %v77 = vadd.f32 %v76, 3.1415927
    %v78 = vmul.f32 %v77, %v33
    %v79 = vmul.f32 %v44, %v61
    %v80 = vmul.f32 %v44, %v78
    %81 = vst [vmem:[#allocation5] sm:$0xff] %v79
    %82 = vst [vmem:[#allocation5 + $0x8] sm:$0xff] %v80
    // Predicated region
    $region10: #{tpu_custom_call.1} parent=1 // pred_check
      _
    $region11: #{tpu_custom_call.1} parent=1 // pred_check_branch
      %84 = sbr.rel (0) target = $region13
    $region12: #{tpu_custom_call.1} parent=1 // pred_region
      %s86 = ssub.s32 256, 256
      %87 = vsyncadd [#allocation4], %s86
      %s88 = sshll.u32 [#allocation5], 4
      %s89 = int_to_ptr.vmem [resolvable:$true] %s88
      %94 = dma.vmem_to_hbm [thread:$0]  %s89, 256, %s1, [#allocation4], 128, 128, 8
    $region13: #{tpu_custom_call.1} parent=1 // pred_fallthru
      _
    // Predicated region
    $region14: #{tpu_custom_call.1} parent=1 // pred_check
      _
    $region15: #{tpu_custom_call.1} parent=1 // pred_check_branch
      %96 = sbr.rel (0) target = $region17
    $region16: #{tpu_custom_call.1} parent=1 // pred_region
      %97 = dma.done [#allocation4], 256
    $region17: #{tpu_custom_call.1} parent=1 // pred_fallthru
      _
    %98 = vsyncpa [#allocation3], 1
    %99 = vsyncpa [#allocation4], 1

</llo_original>
